<compile_context>
chip_gen: v7x
topology: tpu7x:2x2x1
jax: 0.10.0
libtpu: 0.0.40
codegen_flags: <defaults>
</compile_context>

<pallas_src>
import functools

import jax
import jax.numpy as jnp
from jax.experimental import pallas as pl
from jax.experimental.pallas import tpu as pltpu

HIDDEN_SIZE = 128
LANE = 128
SMALL_K_THRESHOLD = 16   # below this, layer 1 runs on the VPU instead of the MXU


def _round_up(x, m):
    return (x + m - 1) // m * m


def policy_net_kernel(x_ref, w1_ref, b1_ref, w2_ref, b2_ref, w3_ref, b3_ref,
                      out_ref):
    """One batch tile: Linear -> ReLU -> Linear -> ReLU -> Linear -> Softmax."""
    S = x_ref.shape[-1]          # state size (static)
    A = out_ref.shape[-1]        # true (un-padded) action size (static)

    x = x_ref[...]                                          # (TB, S) f32

    # ---- Linear 1 + ReLU ----
    if S <= SMALL_K_THRESHOLD:
        # Tiny contraction dim: an MXU pass would be >95% zero padding, so do
        # S unrolled VPU broadcast multiply-adds (outer-product accumulation).
        w1 = w1_ref[...]                                    # (S, H) f32
        h1 = x[:, 0:1] * w1[0:1, :]
        for k in range(1, S):
            h1 = h1 + x[:, k:k + 1] * w1[k:k + 1, :]
    else:
        h1 = jnp.dot(x.astype(jnp.bfloat16), w1_ref[...],   # w1 pre-cast bf16
                     preferred_element_type=jnp.float32)
    h1 = jnp.maximum(h1 + b1_ref[...], 0.0)                 # (TB, H) f32

    # ---- Linear 2 + ReLU (bf16 MXU operands, f32 accumulate) ----
    h2 = jnp.dot(h1.astype(jnp.bfloat16), w2_ref[...],
                 preferred_element_type=jnp.float32)
    h2 = jnp.maximum(h2 + b2_ref[...], 0.0)                 # (TB, H) f32

    # ---- Linear 3 (output lanes padded to 128 for the MXU, then sliced) ----
    logits = jnp.dot(h2.astype(jnp.bfloat16), w3_ref[...],
                     preferred_element_type=jnp.float32)    # (TB, A_pad) f32
    logits = logits[:, :A] + b3_ref[...]                    # (TB, A) f32

    # ---- Numerically stable softmax over the true A lanes.
    # Exact division (not approx reciprocal) so each row sums to 1.
    m = jnp.max(logits, axis=-1, keepdims=True)
    e = jnp.exp(logits - m)
    denom = jnp.sum(e, axis=-1, keepdims=True)
    out_ref[...] = (e / denom).astype(out_ref.dtype)        # narrow (TB, A) store


def prepare_params(params):
    """One-time weight prep (pad / cast / reshape). Call once, reuse per step."""
    w1, b1, w2, b2, w3, b3 = params
    S, H = w1.shape
    A = w3.shape[1]
    A_pad = _round_up(max(A, LANE), LANE)

    # Layer-3 weights zero-padded to 128 output lanes for a dense MXU N dim;
    # the kernel slices logits back to A before the softmax.
    w3_p = jnp.zeros((H, A_pad), jnp.bfloat16).at[:, :A].set(
        w3.astype(jnp.bfloat16))
    # Layer-1 weights: f32 for the VPU path (tiny S), bf16 for the MXU path.
    w1_p = w1.astype(jnp.float32 if S <= SMALL_K_THRESHOLD else jnp.bfloat16)

    return (w1_p,
            b1.reshape(1, H).astype(jnp.float32),
            w2.astype(jnp.bfloat16),
            b2.reshape(1, H).astype(jnp.float32),
            w3_p,
            b3.reshape(1, A).astype(jnp.float32))


@functools.partial(jax.jit, static_argnames=("batch_tile",))
def policy_net_forward(state, prepared, *, batch_tile=2048):
    """state: (B, S) f32, prepared = prepare_params(params) -> (B, A) probs."""
    w1, b1, w2, b2, w3, b3 = prepared
    B, S = state.shape
    H = w1.shape[1]
    A_pad = w3.shape[1]
    A = b3.shape[1]

    # Batch tiling: large tiles amortize the ~0.35 us/step grid overhead and
    # give the input/output DMAs larger bursts; keep >= 2 grid steps when
    # possible so the "parallel" batch axis shards across both v7x TCs.
    B8 = _round_up(B, 8)
    TB = min(_round_up(batch_tile, 8), B8)
    if B8 // TB < 2 and B8 >= 16:
        TB = _round_up(-(-B8 // 2), 8)
    B_pad = _round_up(B8, TB)

    x = state.astype(jnp.float32)
    if B_pad != B:
        x = jnp.pad(x, ((0, B_pad - B), (0, 0)))

    const = lambda shape: pl.BlockSpec(shape, lambda i: (0,) * len(shape))

    out = pl.pallas_call(
        policy_net_kernel,
        out_shape=jax.ShapeDtypeStruct((B_pad, A), jnp.float32),
        grid=(B_pad // TB,),
        in_specs=[
            pl.BlockSpec((TB, S), lambda i: (i, 0)),   # state: tiled over batch
            const((S, H)), const((1, H)),              # layer 1
            const((H, H)), const((1, H)),              # layer 2
            const((H, A_pad)), const((1, A)),          # layer 3
        ],
        # Narrow (TB, A) output block: A equals the full trailing dim, so this
        # is legal and avoids writing a 128-lane padded f32 slab to HBM.
        out_specs=pl.BlockSpec((TB, A), lambda i: (i, 0)),
        # VMEM footprint (tiles + weights) is a few MiB even at TB=4096, well
        # under the default scoped limit on v5e/v6e/v7x -> leave it at default.
        compiler_params=pltpu.CompilerParams(
            dimension_semantics=("parallel",),         # megacore sharding on v7x
        ),
    )(x, w1, b1, w2, b2, w3, b3)

    return out[:B] if B_pad != B else out


def init_params(key, state_size, action_size):
    """Deterministic synthetic parameters ((in, out) layout, Kaiming-ish)."""
    ks = jax.random.split(key, 6)

    def lin(kw, kb, fan_in, fan_out):
        bound = 1.0 / jnp.sqrt(fan_in)
        w = jax.random.uniform(kw, (fan_in, fan_out), jnp.float32, -bound, bound)
        b = jax.random.uniform(kb, (1, fan_out), jnp.float32, -bound, bound)
        return w, b

    w1, b1 = lin(ks[0], ks[1], state_size, HIDDEN_SIZE)
    w2, b2 = lin(ks[2], ks[3], HIDDEN_SIZE, HIDDEN_SIZE)
    w3, b3 = lin(ks[4], ks[5], HIDDEN_SIZE, action_size)
    return (w1, b1, w2, b2, w3, b3)


def _reference(state, params):
    w1, b1, w2, b2, w3, b3 = params
    h = jnp.maximum(state @ w1 + b1, 0.0)
    h = jnp.maximum(h @ w2 + b2, 0.0)
    return jax.nn.softmax(h @ w3 + b3, axis=-1)


if __name__ == "__main__":
    key = jax.random.PRNGKey(0)
    k_state, k_params, k_big = jax.random.split(key, 3)

    BATCH = 8
    STATE_SIZE = 4      # CartPole-like observation
    ACTION_SIZE = 2

    params = init_params(k_params, STATE_SIZE, ACTION_SIZE)
    prepared = prepare_params(params)          # one-time weight prep (hoisted)

    # --- Small (deployment-shaped) check ---
    state = jax.random.normal(k_state, (BATCH, STATE_SIZE), jnp.float32)
    probs = jax.block_until_ready(policy_net_forward(state, prepared))
    ref = _reference(state, params)
    assert probs.shape == (BATCH, ACTION_SIZE)
    # Layers 2/3 use bf16 MXU operands (f32 accumulate) -> small delta vs the
    # pure-f32 reference; this is the intended accuracy contract.
    assert jnp.allclose(probs, ref, atol=2e-2, rtol=2e-2)
    assert jnp.allclose(jnp.sum(probs, axis=-1), 1.0, atol=1e-4)

    # --- Larger batch: exercises multi-step grid + batch padding ---
    big_state = jax.random.normal(k_big, (300, STATE_SIZE), jnp.float32)
    big_probs = jax.block_until_ready(
        policy_net_forward(big_state, prepared, batch_tile=128))
    big_ref = _reference(big_state, params)
    assert big_probs.shape == (300, ACTION_SIZE)
    assert jnp.allclose(big_probs, big_ref, atol=2e-2, rtol=2e-2)
    assert jnp.allclose(jnp.sum(big_probs, axis=-1), 1.0, atol=1e-4)

    print("KERNEL_OK")
</pallas_src>

<mosaic_0001>
module attributes {stable_mosaic.version = 11 : i64} {
  func.func @policy_net_kernel(%arg0: i32, %arg1: memref<8x4xf32, #tpu.memory_space<vmem>>, %arg2: memref<4x128xf32, #tpu.memory_space<vmem>>, %arg3: memref<1x128xf32, #tpu.memory_space<vmem>>, %arg4: memref<128x128xbf16, #tpu.memory_space<vmem>>, %arg5: memref<1x128xf32, #tpu.memory_space<vmem>>, %arg6: memref<128x128xbf16, #tpu.memory_space<vmem>>, %arg7: memref<1x2xf32, #tpu.memory_space<vmem>>, %arg8: memref<8x2xf32, #tpu.memory_space<vmem>>) attributes {dimension_semantics = [#tpu.dimension_semantics<parallel>], iteration_bounds = array<i64: 1>, scalar_prefetch = 0 : i64, scratch_operands = 0 : i64, tpu.core_type = #tpu.core_type<tc>, window_params = [{transform_indices = @transform_0, window_bounds = array<i64: 8, 4>}, {pipeline_mode = #tpu.pipeline_mode<synchronous>, transform_indices = @transform_1, window_bounds = array<i64: 4, 128>}, {pipeline_mode = #tpu.pipeline_mode<synchronous>, transform_indices = @transform_2, window_bounds = array<i64: 1, 128>}, {pipeline_mode = #tpu.pipeline_mode<synchronous>, transform_indices = @transform_3, window_bounds = array<i64: 128, 128>}, {pipeline_mode = #tpu.pipeline_mode<synchronous>, transform_indices = @transform_4, window_bounds = array<i64: 1, 128>}, {pipeline_mode = #tpu.pipeline_mode<synchronous>, transform_indices = @transform_5, window_bounds = array<i64: 128, 128>}, {pipeline_mode = #tpu.pipeline_mode<synchronous>, transform_indices = @transform_6, window_bounds = array<i64: 1, 2>}, {transform_indices = @transform_7, window_bounds = array<i64: 8, 2>}]} {
    %c0 = arith.constant 0 : index
    %c0_0 = arith.constant 0 : index
    %0 = vector.load %arg1[%c0, %c0_0] : memref<8x4xf32, #tpu.memory_space<vmem>>, vector<8x4xf32>
    %c0_1 = arith.constant 0 : index
    %c0_2 = arith.constant 0 : index
    %1 = vector.load %arg2[%c0_1, %c0_2] : memref<4x128xf32, #tpu.memory_space<vmem>>, vector<4x128xf32>
    %2 = vector.extract_strided_slice %0 {offsets = [0, 0], sizes = [8, 1], strides = [1, 1]} : vector<8x4xf32> to vector<8x1xf32>
    %3 = vector.extract_strided_slice %1 {offsets = [0, 0], sizes = [1, 128], strides = [1, 1]} : vector<4x128xf32> to vector<1x128xf32>
    %4 = vector.broadcast %2 : vector<8x1xf32> to vector<8x128xf32>
    %5 = vector.broadcast %3 : vector<1x128xf32> to vector<8x128xf32>
    %6 = arith.mulf %4, %5 : vector<8x128xf32>
    %7 = vector.extract_strided_slice %0 {offsets = [0, 1], sizes = [8, 1], strides = [1, 1]} : vector<8x4xf32> to vector<8x1xf32>
    %8 = vector.extract_strided_slice %1 {offsets = [1, 0], sizes = [1, 128], strides = [1, 1]} : vector<4x128xf32> to vector<1x128xf32>
    %9 = vector.broadcast %7 : vector<8x1xf32> to vector<8x128xf32>
    %10 = vector.broadcast %8 : vector<1x128xf32> to vector<8x128xf32>
    %11 = arith.mulf %9, %10 : vector<8x128xf32>
    %12 = arith.addf %6, %11 : vector<8x128xf32>
    %13 = vector.extract_strided_slice %0 {offsets = [0, 2], sizes = [8, 1], strides = [1, 1]} : vector<8x4xf32> to vector<8x1xf32>
    %14 = vector.extract_strided_slice %1 {offsets = [2, 0], sizes = [1, 128], strides = [1, 1]} : vector<4x128xf32> to vector<1x128xf32>
    %15 = vector.broadcast %13 : vector<8x1xf32> to vector<8x128xf32>
    %16 = vector.broadcast %14 : vector<1x128xf32> to vector<8x128xf32>
    %17 = arith.mulf %15, %16 : vector<8x128xf32>
    %18 = arith.addf %12, %17 : vector<8x128xf32>
    %19 = vector.extract_strided_slice %0 {offsets = [0, 3], sizes = [8, 1], strides = [1, 1]} : vector<8x4xf32> to vector<8x1xf32>
    %20 = vector.extract_strided_slice %1 {offsets = [3, 0], sizes = [1, 128], strides = [1, 1]} : vector<4x128xf32> to vector<1x128xf32>
    %21 = vector.broadcast %19 : vector<8x1xf32> to vector<8x128xf32>
    %22 = vector.broadcast %20 : vector<1x128xf32> to vector<8x128xf32>
    %23 = arith.mulf %21, %22 : vector<8x128xf32>
    %24 = arith.addf %18, %23 : vector<8x128xf32>
    %c0_3 = arith.constant 0 : index
    %c0_4 = arith.constant 0 : index
    %25 = vector.load %arg3[%c0_3, %c0_4] : memref<1x128xf32, #tpu.memory_space<vmem>>, vector<1x128xf32>
    %26 = vector.broadcast %25 : vector<1x128xf32> to vector<8x128xf32>
    %27 = arith.addf %24, %26 : vector<8x128xf32>
    %cst = arith.constant 0.000000e+00 : f32
    %28 = vector.broadcast %cst : f32 to vector<8x128xf32>
    %29 = arith.maximumf %27, %28 : vector<8x128xf32>
    %30 = arith.truncf %29 : vector<8x128xf32> to vector<8x128xbf16>
    %c0_5 = arith.constant 0 : index
    %c0_6 = arith.constant 0 : index
    %31 = vector.load %arg4[%c0_5, %c0_6] : memref<128x128xbf16, #tpu.memory_space<vmem>>, vector<128x128xbf16>
    %cst_7 = arith.constant dense<0.000000e+00> : vector<8x128xf32>
    %32 = tpu.matmul %30, %31, %cst_7 {dimension_numbers = #tpu.dot_dimension_numbers<[1], [0], [0], [1], [0, 0, 1, 1], [], []>} : vector<8x128xbf16>, vector<128x128xbf16>, vector<8x128xf32> -> vector<8x128xf32>
    %c0_8 = arith.constant 0 : index
    %c0_9 = arith.constant 0 : index
    %33 = vector.load %arg5[%c0_8, %c0_9] : memref<1x128xf32, #tpu.memory_space<vmem>>, vector<1x128xf32>
    %34 = vector.broadcast %33 : vector<1x128xf32> to vector<8x128xf32>
    %35 = arith.addf %32, %34 : vector<8x128xf32>
    %cst_10 = arith.constant 0.000000e+00 : f32
    %36 = vector.broadcast %cst_10 : f32 to vector<8x128xf32>
    %37 = arith.maximumf %35, %36 : vector<8x128xf32>
    %38 = arith.truncf %37 : vector<8x128xf32> to vector<8x128xbf16>
    %c0_11 = arith.constant 0 : index
    %c0_12 = arith.constant 0 : index
    %39 = vector.load %arg6[%c0_11, %c0_12] : memref<128x128xbf16, #tpu.memory_space<vmem>>, vector<128x128xbf16>
    %cst_13 = arith.constant dense<0.000000e+00> : vector<8x128xf32>
    %40 = tpu.matmul %38, %39, %cst_13 {dimension_numbers = #tpu.dot_dimension_numbers<[1], [0], [0], [1], [0, 0, 1, 1], [], []>} : vector<8x128xbf16>, vector<128x128xbf16>, vector<8x128xf32> -> vector<8x128xf32>
    %41 = vector.extract_strided_slice %40 {offsets = [0, 0], sizes = [8, 2], strides = [1, 1]} : vector<8x128xf32> to vector<8x2xf32>
    %c0_14 = arith.constant 0 : index
    %c0_15 = arith.constant 0 : index
    %42 = vector.load %arg7[%c0_14, %c0_15] : memref<1x2xf32, #tpu.memory_space<vmem>>, vector<1x2xf32>
    %43 = vector.broadcast %42 : vector<1x2xf32> to vector<8x2xf32>
    %44 = arith.addf %41, %43 : vector<8x2xf32>
    %cst_16 = arith.constant dense<0xFF800000> : vector<8xf32>
    %45 = vector.multi_reduction <maximumf>, %44, %cst_16 [1] : vector<8x2xf32> to vector<8xf32>
    %46 = vector.shape_cast %45 : vector<8xf32> to vector<8x1xf32>
    %47 = vector.broadcast %46 : vector<8x1xf32> to vector<8x2xf32>
    %48 = arith.subf %44, %47 : vector<8x2xf32>
    %49 = math.exp %48 : vector<8x2xf32>
    %cst_17 = arith.constant dense<0.000000e+00> : vector<8xf32>
    %50 = vector.multi_reduction <add>, %49, %cst_17 [1] : vector<8x2xf32> to vector<8xf32>
    %51 = vector.shape_cast %50 : vector<8xf32> to vector<8x1xf32>
    %52 = vector.broadcast %51 : vector<8x1xf32> to vector<8x2xf32>
    %53 = arith.divf %49, %52 : vector<8x2xf32>
    %c0_18 = arith.constant 0 : index
    %c0_19 = arith.constant 0 : index
    %54 = vector.load %arg8[%c0_18, %c0_19] : memref<8x2xf32, #tpu.memory_space<vmem>>, vector<8x2xf32>
    tpu.vector_store %arg8[%c0_18, %c0_19], %53 {strides = array<i32>} : memref<8x2xf32, #tpu.memory_space<vmem>>, vector<8x2xf32>,
    return
  }
  func.func @transform_0(%arg0: i32) -> (i32, i32) {
    %c0_i32 = arith.constant 0 : i32
    %c0_i32_0 = arith.constant 0 : i32
    return %arg0, %c0_i32 : i32, i32
  }
  func.func @transform_1(%arg0: i32) -> (i32, i32) {
    %c0_i32 = arith.constant 0 : i32
    %c0_i32_0 = arith.constant 0 : i32
    %c0_i32_1 = arith.constant 0 : i32
    return %c0_i32, %c0_i32_0 : i32, i32
  }
  func.func @transform_2(%arg0: i32) -> (i32, i32) {
    %c0_i32 = arith.constant 0 : i32
    %c0_i32_0 = arith.constant 0 : i32
    %c0_i32_1 = arith.constant 0 : i32
    return %c0_i32, %c0_i32_0 : i32, i32
  }
  func.func @transform_3(%arg0: i32) -> (i32, i32) {
    %c0_i32 = arith.constant 0 : i32
    %c0_i32_0 = arith.constant 0 : i32
    %c0_i32_1 = arith.constant 0 : i32
    return %c0_i32, %c0_i32_0 : i32, i32
  }
  func.func @transform_4(%arg0: i32) -> (i32, i32) {
    %c0_i32 = arith.constant 0 : i32
    %c0_i32_0 = arith.constant 0 : i32
    %c0_i32_1 = arith.constant 0 : i32
    return %c0_i32, %c0_i32_0 : i32, i32
  }
  func.func @transform_5(%arg0: i32) -> (i32, i32) {
    %c0_i32 = arith.constant 0 : i32
    %c0_i32_0 = arith.constant 0 : i32
    %c0_i32_1 = arith.constant 0 : i32
    return %c0_i32, %c0_i32_0 : i32, i32
  }
  func.func @transform_6(%arg0: i32) -> (i32, i32) {
    %c0_i32 = arith.constant 0 : i32
    %c0_i32_0 = arith.constant 0 : i32
    %c0_i32_1 = arith.constant 0 : i32
    return %c0_i32, %c0_i32_0 : i32, i32
  }
  func.func @transform_7(%arg0: i32) -> (i32, i32) {
    %c0_i32 = arith.constant 0 : i32
    %c0_i32_0 = arith.constant 0 : i32
    return %arg0, %c0_i32 : i32, i32
  }
}

</mosaic_0001>

<llo_original>
// kernel: policy_net_forward.1
$region0: #{policy_net_forward.1}
  #allocation0 [shape = 'u32[]', space=smem, size = 0x4, offset = 0x4, fixed_abs, tag = 'smem constant byte address 0x4 - core index']
  #allocation1 [shape = 'u32[144,128]{1,0:T(1,128)}', space=vmem, size = 0x12000, scoped, tag = 'internal scratch']
  %s0 = inlined_call_operand.vmem [shape: f32[8,4], index: 0, kind: input, shape index: {}]
  %s1 = inlined_call_operand.vmem [shape: f32[4,128], index: 1, kind: input, shape index: {}]
  %s2 = inlined_call_operand.vmem [shape: f32[1,128], index: 2, kind: input, shape index: {}]
  %s3 = inlined_call_operand.hbm [shape: bf16[128,128], index: 3, kind: input, shape index: {}]
  %s4 = inlined_call_operand.vmem [shape: f32[1,128], index: 4, kind: input, shape index: {}]
  %s5 = inlined_call_operand.hbm [shape: bf16[128,128], index: 5, kind: input, shape index: {}]
  %s6 = inlined_call_operand.vmem [shape: f32[1,2], index: 6, kind: input, shape index: {}]
  %s7 = inlined_call_operand.vmem [shape: f32[8,2], index: 7, kind: output, shape index: {}]
  %s8 = sld [smem:[#allocation0]]
  $region46: #{policy_net_forward.1} parent=0
    _
  %s10 = ssub.s32 1, %s8
  %s11 = scalar_select 0, %s10, %s8
  $region1: #{policy_net_forward.1} parent=0
    #allocation2 [shape = 'u8[32768]{0}', space=vmem, size = 0x8000, scoped, tag = 'input window, operand 3, single buffered']
    #allocation3 [shape = 's32[1]{0}', space=sflag, size = 0x4, scoped, tag = 'scoped memory for policy_net_forward.1']
    #allocation4 [shape = 'u8[32768]{0}', space=vmem, size = 0x8000, scoped, tag = 'input window, operand 5, single buffered']
    #allocation5 [shape = 's32[1]{0}', space=sflag, size = 0x4, scoped, tag = 'scoped memory for policy_net_forward.1']
    %12 = vsyncpa [#allocation3], 0
    %13 = vsyncpa [#allocation5], 0
    // Predicated region
    $region2: #{policy_net_forward.1} parent=1 // pred_check
      _
    $region3: #{policy_net_forward.1} parent=1 // pred_check_branch
      %15 = sbr.rel (0) target = $region5
    $region4: #{policy_net_forward.1} parent=1 // pred_region
      _
    $region5: #{policy_net_forward.1} parent=1 // pred_fallthru
      _
    // Predicated region
    $region6: #{policy_net_forward.1} parent=1 // pred_check
      _
    $region7: #{policy_net_forward.1} parent=1 // pred_check_branch
      %17 = sbr.rel (0) target = $region9
    $region8: #{policy_net_forward.1} parent=1 // pred_region
      _
    $region9: #{policy_net_forward.1} parent=1 // pred_fallthru
      _
    // Predicated region
    $region10: #{policy_net_forward.1} parent=1 // pred_check
      _
    $region11: #{policy_net_forward.1} parent=1 // pred_check_branch
      %19 = sbr.rel (0) target = $region13
    $region12: #{policy_net_forward.1} parent=1 // pred_region
      _
    $region13: #{policy_net_forward.1} parent=1 // pred_fallthru
      _
    // Predicated region
    $region14: #{policy_net_forward.1} parent=1 // pred_check
      _
    $region15: #{policy_net_forward.1} parent=1 // pred_check_branch
      %21 = sbr.rel (0) target = $region17
    $region16: #{policy_net_forward.1} parent=1 // pred_region
      %s23 = ssub.s32 1024, 1024
      %24 = vsyncadd [#allocation3], %s23
      %s25 = sshll.u32 [#allocation2], 4
      %s26 = int_to_ptr.vmem [resolvable:$true] %s25
      %31 = dma.hbm_to_vmem [thread:$0]  %s3, 1024, %s26, [#allocation3], 64, 64, 4
    $region17: #{policy_net_forward.1} parent=1 // pred_fallthru
      _
    // Predicated region
    $region18: #{policy_net_forward.1} parent=1 // pred_check
      _
    $region19: #{policy_net_forward.1} parent=1 // pred_check_branch
      %33 = sbr.rel (0) target = $region21
    $region20: #{policy_net_forward.1} parent=1 // pred_region
      _
    $region21: #{policy_net_forward.1} parent=1 // pred_fallthru
      _
    // Predicated region
    $region22: #{policy_net_forward.1} parent=1 // pred_check
      _
    $region23: #{policy_net_forward.1} parent=1 // pred_check_branch
      %35 = sbr.rel (0) target = $region25
    $region24: #{policy_net_forward.1} parent=1 // pred_region
      %s37 = ssub.s32 1024, 1024
      %38 = vsyncadd [#allocation5], %s37
      %s39 = sshll.u32 [#allocation4], 4
      %s40 = int_to_ptr.vmem [resolvable:$true] %s39
      %45 = dma.hbm_to_vmem [thread:$0]  %s5, 1024, %s40, [#allocation5], 64, 64, 4
    $region25: #{policy_net_forward.1} parent=1 // pred_fallthru
      _
    // Predicated region
    $region26: #{policy_net_forward.1} parent=1 // pred_check
      _
    $region27: #{policy_net_forward.1} parent=1 // pred_check_branch
      %47 = sbr.rel (0) target = $region29
    $region28: #{policy_net_forward.1} parent=1 // pred_region
      _
    $region29: #{policy_net_forward.1} parent=1 // pred_fallthru
      _
    // Predicated region
    $region30: #{policy_net_forward.1} parent=1 // pred_check
      _
    $region31: #{policy_net_forward.1} parent=1 // pred_check_branch
      %49 = sbr.rel (0) target = $region33
    $region32: #{policy_net_forward.1} parent=1 // pred_region
      %50 = dma.done [#allocation3], 1024
    $region33: #{policy_net_forward.1} parent=1 // pred_fallthru
      _
    // Predicated region
    $region34: #{policy_net_forward.1} parent=1 // pred_check
      _
    $region35: #{policy_net_forward.1} parent=1 // pred_check_branch
      %52 = sbr.rel (0) target = $region37
    $region36: #{policy_net_forward.1} parent=1 // pred_region
      %53 = dma.done [#allocation5], 1024
    $region37: #{policy_net_forward.1} parent=1 // pred_fallthru
      _
    %v55 = vld [vmem:[%s0] sm:$0xff]
    %v56 = vld [vmem:[%s1] sm:$0xf]
    %58 = vset.pattern.permute.xlu0 0
    %59 = vperm.xlu0 %58, %v55
    %v60 = vpop.permute.xlu0 %59
    %v62 = vlaneseq
    %v63 = vshrl.u32 %v62, 7
    %v64 = vsub.s32 0, %v63
    %v65 = vrot.slane %v56, %v64
    %v66 = vmul.f32 %v60, %v65
    %67 = vset.pattern.permute.xlu0 1
    %68 = vperm.xlu0 %67, %v55
    %v69 = vpop.permute.xlu0 %68
    %v71 = vlaneseq
    %v72 = vshrl.u32 %v71, 7
    %v73 = vsub.s32 1, %v72
    %v74 = vrot.slane %v56, %v73
    %v75 = vmul.f32 %v69, %v74
    %v76 = vadd.f32 %v66, %v75
    %77 = vset.pattern.permute.xlu0 2
    %78 = vperm.xlu0 %77, %v55
    %v79 = vpop.permute.xlu0 %78
    %v81 = vlaneseq
    %v82 = vshrl.u32 %v81, 7
    %v83 = vsub.s32 2, %v82
    %v84 = vrot.slane %v56, %v83
    %v85 = vmul.f32 %v79, %v84
    %v86 = vadd.f32 %v76, %v85
    %87 = vset.pattern.permute.xlu0 3
    %88 = vperm.xlu0 %87, %v55
    %v89 = vpop.permute.xlu0 %88
    %v91 = vlaneseq
    %v92 = vshrl.u32 %v91, 7
    %v93 = vsub.s32 3, %v92
    %v94 = vrot.slane %v56, %v93
    %v95 = vmul.f32 %v89, %v94
    %v96 = vadd.f32 %v86, %v95
    %v97 = vld [vmem:[%s2] sm:$0x1]
    %v99 = vlaneseq
    %v100 = vshrl.u32 %v99, 7
    %v101 = vsub.s32 0, %v100
    %v102 = vrot.slane %v97, %v101
    %v104 = vadd.f32 %v96, %v102
    %v105 = vmax.f32 %v104, 0.0
    %v106 = vpack.c.bf16 %v105, %v105
    %v107 = vld [vmem:[#allocation2] sm:$0xf]
    %v108 = vld [vmem:[#allocation2 + $0x4] sm:$0xf]
    %v109 = vld [vmem:[#allocation2 + $0x8] sm:$0xf]
    %v110 = vld [vmem:[#allocation2 + $0xc] sm:$0xf]
    %v111 = vld [vmem:[#allocation2 + $0x10] sm:$0xf]
    %v112 = vld [vmem:[#allocation2 + $0x14] sm:$0xf]
    %v113 = vld [vmem:[#allocation2 + $0x18] sm:$0xf]
    %v114 = vld [vmem:[#allocation2 + $0x1c] sm:$0xf]
    %v115 = vld [vmem:[#allocation2 + $0x20] sm:$0xf]
    %v116 = vld [vmem:[#allocation2 + $0x24] sm:$0xf]
    %v117 = vld [vmem:[#allocation2 + $0x28] sm:$0xf]
    %v118 = vld [vmem:[#allocation2 + $0x2c] sm:$0xf]
    %v119 = vld [vmem:[#allocation2 + $0x30] sm:$0xf]
    %v120 = vld [vmem:[#allocation2 + $0x34] sm:$0xf]
    %v121 = vld [vmem:[#allocation2 + $0x38] sm:$0xf]
    %v122 = vld [vmem:[#allocation2 + $0x3c] sm:$0xf]
    %v123 = vld [vmem:[%s4] sm:$0x1]
    %v125 = vlaneseq
    %v126 = vshrl.u32 %v125, 7
    %v127 = vsub.s32 0, %v126
    %v128 = vrot.slane %v123, %v127
    %v146 = vunpack.c.l.b16 %v107
    %v147 = vunpack.c.l.b16 %v108
    %v148 = vunpack.c.l.b16 %v109
    %v149 = vunpack.c.l.b16 %v110
    %v150 = vunpack.c.l.b16 %v111
    %v151 = vunpack.c.l.b16 %v112
    %v152 = vunpack.c.l.b16 %v113
    %v153 = vunpack.c.l.b16 %v114
    %v154 = vunpack.c.l.b16 %v115
    %v155 = vunpack.c.l.b16 %v116
    %v156 = vunpack.c.l.b16 %v117
    %v157 = vunpack.c.l.b16 %v118
    %v158 = vunpack.c.l.b16 %v119
    %v159 = vunpack.c.l.b16 %v120
    %v160 = vunpack.c.l.b16 %v121
    %v161 = vunpack.c.l.b16 %v122
    %v162 = vpack.c.b16 %v147, %v146
    %v163 = vpack.c.b16 %v149, %v148
    %v164 = vpack.c.b16 %v151, %v150
    %v165 = vpack.c.b16 %v153, %v152
    %v166 = vpack.c.b16 %v155, %v154
    %v167 = vpack.c.b16 %v157, %v156
    %v168 = vpack.c.b16 %v159, %v158
    %v169 = vpack.c.b16 %v161, %v160
    %178 = vmatprep.subr.bf16.mxu0 0
    %179 = vmatpush1.bf16.msra.mxu0 %v162
    %180 = vmatprep.subr.bf16.mxu0 0
    %181 = vmatpush1.bf16.msra.mxu0 %v163
    %182 = vmatprep.subr.bf16.mxu0 0
    %183 = vmatpush1.bf16.msra.mxu0 %v164
    %184 = vmatprep.subr.bf16.mxu0 0
    %185 = vmatpush1.bf16.msra.mxu0 %v165
    %186 = vmatprep.subr.bf16.mxu0 0
    %187 = vmatpush1.bf16.msra.mxu0 %v166
    %188 = vmatprep.subr.bf16.mxu0 0
    %189 = vmatpush1.bf16.msra.mxu0 %v167
    %190 = vmatprep.subr.bf16.mxu0 0
    %191 = vmatpush1.bf16.msra.mxu0 %v168
    %192 = vmatprep.subr.bf16.mxu0 0
    %193 = vmatpush1.bf16.msra.mxu0 %v169
    %194 = vmatprep.subr.bf16.mxu0 0
    %195 = vmatpush1.bf16.msra.mxu0 0
    %196 = vmatprep.subr.bf16.mxu0 0
    %197 = vmatpush1.bf16.msra.mxu0 0
    %198 = vmatprep.subr.bf16.mxu0 0
    %199 = vmatpush1.bf16.msra.mxu0 0
    %200 = vmatprep.subr.bf16.mxu0 0
    %201 = vmatpush1.bf16.msra.mxu0 0
    %202 = vmatprep.subr.bf16.mxu0 0
    %203 = vmatpush1.bf16.msra.mxu0 0
    %204 = vmatprep.subr.bf16.mxu0 0
    %205 = vmatpush1.bf16.msra.mxu0 0
    %206 = vmatprep.subr.bf16.mxu0 0
    %207 = vmatpush1.bf16.msra.mxu0 0
    %208 = vmatprep.subr.bf16.mxu0 0
    %209 = vmatpush1.bf16.msra.mxu0 0
    %210 = vmatprep.mubr.bf16.mxu0 0
    %211 = vmatmul.mubr.bf16.gmra.mrb[0].mxu0 %v106
    %v212 = vpop.f32.mrb[0].mxu0
    %v213 = vadd.f32 %v128, %v212
    %v214 = vpop.f32.mrb[0].mxu0
    %v215 = vpop.f32.mrb[0].mxu0
    %v216 = vpop.f32.mrb[0].mxu0
    %217 = vdwg.mxu0
    %v218 = vmax.f32 %v213, 0.0
    %v219 = vpack.c.bf16 %v218, %v218
    %v220 = vld [vmem:[#allocation4] sm:$0xf]
    %v221 = vld [vmem:[#allocation4 + $0x4] sm:$0xf]
    %v222 = vld [vmem:[#allocation4 + $0x8] sm:$0xf]
    %v223 = vld [vmem:[#allocation4 + $0xc] sm:$0xf]
    %v224 = vld [vmem:[#allocation4 + $0x10] sm:$0xf]
    %v225 = vld [vmem:[#allocation4 + $0x14] sm:$0xf]
    %v226 = vld [vmem:[#allocation4 + $0x18] sm:$0xf]
    %v227 = vld [vmem:[#allocation4 + $0x1c] sm:$0xf]
    %v228 = vld [vmem:[#allocation4 + $0x20] sm:$0xf]
    %v229 = vld [vmem:[#allocation4 + $0x24] sm:$0xf]
    %v230 = vld [vmem:[#allocation4 + $0x28] sm:$0xf]
    %v231 = vld [vmem:[#allocation4 + $0x2c] sm:$0xf]
    %v232 = vld [vmem:[#allocation4 + $0x30] sm:$0xf]
    %v233 = vld [vmem:[#allocation4 + $0x34] sm:$0xf]
    %v234 = vld [vmem:[#allocation4 + $0x38] sm:$0xf]
    %v235 = vld [vmem:[#allocation4 + $0x3c] sm:$0xf]
    %v252 = vunpack.c.l.b16 %v220
    %v253 = vunpack.c.l.b16 %v221
    %v254 = vunpack.c.l.b16 %v222
    %v255 = vunpack.c.l.b16 %v223
    %v256 = vunpack.c.l.b16 %v224
    %v257 = vunpack.c.l.b16 %v225
    %v258 = vunpack.c.l.b16 %v226
    %v259 = vunpack.c.l.b16 %v227
    %v260 = vunpack.c.l.b16 %v228
    %v261 = vunpack.c.l.b16 %v229
    %v262 = vunpack.c.l.b16 %v230
    %v263 = vunpack.c.l.b16 %v231
    %v264 = vunpack.c.l.b16 %v232
    %v265 = vunpack.c.l.b16 %v233
    %v266 = vunpack.c.l.b16 %v234
    %v267 = vunpack.c.l.b16 %v235
    %v268 = vpack.c.b16 %v253, %v252
    %v269 = vpack.c.b16 %v255, %v254
    %v270 = vpack.c.b16 %v257, %v256
    %v271 = vpack.c.b16 %v259, %v258
    %v272 = vpack.c.b16 %v261, %v260
    %v273 = vpack.c.b16 %v263, %v262
    %v274 = vpack.c.b16 %v265, %v264
    %v275 = vpack.c.b16 %v267, %v266
    %284 = vmatprep.subr.bf16.mxu0 0
    %285 = vmatpush1.bf16.msra.mxu0 %v268
    %286 = vmatprep.subr.bf16.mxu0 0
    %287 = vmatpush1.bf16.msra.mxu0 %v269
    %288 = vmatprep.subr.bf16.mxu0 0
    %289 = vmatpush1.bf16.msra.mxu0 %v270
    %290 = vmatprep.subr.bf16.mxu0 0
    %291 = vmatpush1.bf16.msra.mxu0 %v271
    %292 = vmatprep.subr.bf16.mxu0 0
    %293 = vmatpush1.bf16.msra.mxu0 %v272
    %294 = vmatprep.subr.bf16.mxu0 0
    %295 = vmatpush1.bf16.msra.mxu0 %v273
    %296 = vmatprep.subr.bf16.mxu0 0
    %297 = vmatpush1.bf16.msra.mxu0 %v274
    %298 = vmatprep.subr.bf16.mxu0 0
    %299 = vmatpush1.bf16.msra.mxu0 %v275
    %300 = vmatprep.subr.bf16.mxu0 0
    %301 = vmatpush1.bf16.msra.mxu0 0
    %302 = vmatprep.subr.bf16.mxu0 0
    %303 = vmatpush1.bf16.msra.mxu0 0
    %304 = vmatprep.subr.bf16.mxu0 0
    %305 = vmatpush1.bf16.msra.mxu0 0
    %306 = vmatprep.subr.bf16.mxu0 0
    %307 = vmatpush1.bf16.msra.mxu0 0
    %308 = vmatprep.subr.bf16.mxu0 0
    %309 = vmatpush1.bf16.msra.mxu0 0
    %310 = vmatprep.subr.bf16.mxu0 0
    %311 = vmatpush1.bf16.msra.mxu0 0
    %312 = vmatprep.subr.bf16.mxu0 0
    %313 = vmatpush1.bf16.msra.mxu0 0
    %314 = vmatprep.subr.bf16.mxu0 0
    %315 = vmatpush1.bf16.msra.mxu0 0
    %316 = vmatprep.mubr.bf16.mxu0 0
    %317 = vmatmul.mubr.bf16.gmra.mrb[0].mxu0 %v219
    %v318 = vpop.f32.mrb[0].mxu0
    %v319 = vadd.f32 0.0, %v318
    %v320 = vpop.f32.mrb[0].mxu0
    %v321 = vpop.f32.mrb[0].mxu0
    %v322 = vpop.f32.mrb[0].mxu0
    %323 = vdwg.mxu0
    %v324 = vld [vmem:[%s6] sm:$0x1]
    %v326 = vlaneseq
    %v327 = vshrl.u32 %v326, 7
    %v328 = vsub.s32 0, %v327
    %v329 = vrot.slane %v324, %v328
    %v331 = vadd.f32 %v319, %v329
    %vm332 = vcmask 15360
    %v333 = vsel %vm332, %v331, -inf
    %334 = vmax.xlane.f32.xlu0 %v333
    %v335 = vpop.xlane.xlu0 %334
    %v336 = vsub.f32 %v331, %v335
    %v337 = vmul.f32 %v336, 1.442695
    %v338 = vpow.pop %v337
    %v339 = vsel %vm332, %v338, 0.0
    %340 = vadd.xlane.f32.xlu0 %v339
    %v341 = vpop.xlane.xlu0 %340
    %v342 = vrcp.pop %v341
    %v343 = vmul.f32 %v338, %v342
    %344 = vst.msk [vmem:[%s7] sm:$0xff] %vm332, %v343
    // Predicated region
    $region38: #{policy_net_forward.1} parent=1 // pred_check
      _
    $region39: #{policy_net_forward.1} parent=1 // pred_check_branch
      %346 = sbr.rel (0) target = $region41
    $region40: #{policy_net_forward.1} parent=1 // pred_region
      _
    $region41: #{policy_net_forward.1} parent=1 // pred_fallthru
      _
    // Predicated region
    $region42: #{policy_net_forward.1} parent=1 // pred_check
      _
    $region43: #{policy_net_forward.1} parent=1 // pred_check_branch
      %348 = sbr.rel (0) target = $region45
    $region44: #{policy_net_forward.1} parent=1 // pred_region
      _
    $region45: #{policy_net_forward.1} parent=1 // pred_fallthru
      _
    %349 = vsyncpa [#allocation3], 1
    %350 = vsyncpa [#allocation5], 1

</llo_original>
